<compile_context>
chip_gen: v7x
topology: tpu7x:2x2x1
jax: 0.10.0
libtpu: 0.0.40
codegen_flags: <defaults>
</compile_context>

<pallas_src>
import functools

import jax
import jax.numpy as jnp
from jax import lax
from jax.experimental import pallas as pl
from jax.experimental.pallas import tpu as pltpu


def _masked_mse_partial_kernel(pred_ref, label_ref, mask_ref, out_ref, *, n_rows):
    i = pl.program_id(0)
    br, mt = pred_ref.shape

    diff = pred_ref[...].astype(jnp.float32) - label_ref[...].astype(jnp.float32)
    sq = diff * diff

    # Mask out the ragged row tail of the last block (garbage beyond row n_rows)
    # and apply the user mask, via select (garbage NaNs cannot propagate).
    row_ids = lax.broadcasted_iota(jnp.int32, (br, 1), 0) + i * br
    valid_row = row_ids < n_rows
    mval = mask_ref[...]
    mbool = mval if mval.dtype == jnp.bool_ else (mval != 0)
    keep = jnp.logical_and(valid_row, mbool)
    masked = jnp.where(keep, sq, jnp.float32(0.0))

    # Fold the row tile onto an (8, M) vreg-shaped slab with pure VPU adds
    # (layout-preserving reshape), then one cross-lane/sublane reduce per step.
    folded = masked.reshape(br // 8, 8, mt).sum(axis=0)
    out_ref[0, 0] = jnp.sum(folded)


def _round_up(x, k):
    return (x + k - 1) // k * k


def masked_mse_loss(pred, label, mask, *, target_rows=1024,
                    vmem_budget_bytes=20 * 1024 * 1024):
    """pred: (1, N, M) float; label: (N, M) int; mask: (N, M) bool -> scalar f32."""
    pred2d = jnp.squeeze(pred, axis=0)            # glue: squeeze(0)
    n, m = pred2d.shape
    assert label.shape == (n, m) and mask.shape == (n, m)

    # Transport in native dtypes (the f32 cast happens in-kernel). Only guard
    # against 64-bit inputs, which Mosaic won't take.
    if jnp.dtype(pred2d.dtype).itemsize > 4:
        pred2d = pred2d.astype(jnp.float32)
    if jnp.dtype(label.dtype).itemsize > 4:
        label = label.astype(jnp.int32)

    pred_b = jnp.dtype(pred2d.dtype).itemsize
    label_b = jnp.dtype(label.dtype).itemsize
    mask_b = jnp.dtype(mask.dtype).itemsize       # bool == 1 byte

    # Row tile: as large as possible while the 3 double-buffered input streams
    # stay within a conservative VMEM budget. Multiple of 32 keeps f32/bf16/i8
    # sublane tiling dense for all three inputs.
    bytes_per_row_double_buffered = (pred_b + label_b + mask_b) * m * 2
    max_rows = max(32, (vmem_budget_bytes // bytes_per_row_double_buffered) // 32 * 32)
    block_rows = min(_round_up(target_rows, 32), max_rows, _round_up(n, 32))
    num_blocks = pl.cdiv(n, block_rows)

    kernel = functools.partial(_masked_mse_partial_kernel, n_rows=n)

    partials = pl.pallas_call(
        kernel,
        out_shape=jax.ShapeDtypeStruct((num_blocks, 1), jnp.float32),
        grid_spec=pltpu.PrefetchScalarGridSpec(
            num_scalar_prefetch=0,
            grid=(num_blocks,),
            in_specs=[
                pl.BlockSpec((block_rows, m), lambda i: (i, 0)),
                pl.BlockSpec((block_rows, m), lambda i: (i, 0)),
                pl.BlockSpec((block_rows, m), lambda i: (i, 0)),
            ],
            out_specs=pl.BlockSpec(
                (1, 1), lambda i: (i, 0), memory_space=pltpu.MemorySpace.SMEM
            ),
        ),
        compiler_params=pltpu.CompilerParams(
            # Independent per-block partial sums -> megacore row-sharding on v7x.
            dimension_semantics=("parallel",),
            vmem_limit_bytes=32 * 1024 * 1024,
        ),
    )(pred2d, label, mask)

    # Tiny epilogue in XLA: sum per-block partials and normalize by m ** 2.
    return jnp.sum(partials) / jnp.float32(m * m)


def masked_mse_loss_ref(pred, label, mask):
    p = jnp.squeeze(pred, axis=0).astype(jnp.float32)
    l = label.astype(jnp.float32)
    loss = (p - l) ** 2
    loss = loss * mask.astype(jnp.float32)
    m = mask.shape[1]
    return jnp.sum(loss) / (m ** 2)


if __name__ == "__main__":
    key = jax.random.PRNGKey(0)

    # Case 1: aligned shapes, f32 pred / int32 label / bool mask.
    k1, k2, k3 = jax.random.split(key, 3)
    N, M = 16, 128
    pred = jax.random.normal(k1, (1, N, M), dtype=jnp.float32)
    label = jax.random.randint(k2, (N, M), minval=0, maxval=5, dtype=jnp.int32)
    mask = jax.random.bernoulli(k3, p=0.5, shape=(N, M))

    out = jax.block_until_ready(masked_mse_loss(pred, label, mask))
    ref = masked_mse_loss_ref(pred, label, mask)
    assert jnp.allclose(out, ref, rtol=1e-5, atol=1e-5), (out, ref)

    # Case 2: ragged shapes + narrow transport dtypes (bf16 pred, int8 label),
    # small row tile to exercise the multi-block + partial-tail masking path.
    k4, k5, k6 = jax.random.split(jax.random.PRNGKey(1), 3)
    N2, M2 = 45, 96
    pred2 = jax.random.normal(k4, (1, N2, M2), dtype=jnp.float32).astype(jnp.bfloat16)
    label2 = jax.random.randint(k5, (N2, M2), minval=0, maxval=5,
                                dtype=jnp.int32).astype(jnp.int8)
    mask2 = jax.random.bernoulli(k6, p=0.5, shape=(N2, M2))

    out2 = jax.block_until_ready(masked_mse_loss(pred2, label2, mask2, target_rows=32))
    ref2 = masked_mse_loss_ref(pred2, label2, mask2)
    assert jnp.allclose(out2, ref2, rtol=1e-4, atol=1e-4), (out2, ref2)

    print("KERNEL_OK")
</pallas_src>

<mosaic_0001>
module attributes {stable_mosaic.version = 11 : i64} {
  func.func @_masked_mse_partial_kernel(%arg0: i32, %arg1: memref<32x128xf32, #tpu.memory_space<vmem>>, %arg2: memref<32x128xi32, #tpu.memory_space<vmem>>, %arg3: memref<32x128xi32, #tpu.memory_space<vmem>>, %arg4: memref<1x1xf32, #tpu.memory_space<smem>>) attributes {dimension_semantics = [#tpu.dimension_semantics<parallel>], iteration_bounds = array<i64: 1>, scalar_prefetch = 0 : i64, scratch_operands = 0 : i64, tpu.core_type = #tpu.core_type<tc>, window_params = [{transform_indices = @transform_0, window_bounds = array<i64: 32, 128>}, {transform_indices = @transform_1, window_bounds = array<i64: 32, 128>}, {transform_indices = @transform_2, window_bounds = array<i64: 32, 128>}, {transform_indices = @transform_3, window_bounds = array<i64: 1, 1>}]} {
    %c0 = arith.constant 0 : index
    %c0_0 = arith.constant 0 : index
    %0 = vector.load %arg1[%c0, %c0_0] : memref<32x128xf32, #tpu.memory_space<vmem>>, vector<32x128xf32>
    %c0_1 = arith.constant 0 : index
    %c0_2 = arith.constant 0 : index
    %1 = vector.load %arg2[%c0_1, %c0_2] : memref<32x128xi32, #tpu.memory_space<vmem>>, vector<32x128xi32>
    %2 = arith.sitofp %1 : vector<32x128xi32> to vector<32x128xf32>
    %3 = arith.subf %0, %2 : vector<32x128xf32>
    %4 = arith.mulf %3, %3 : vector<32x128xf32>
    %5 = tpu.iota {dimensions = array<i32: 0>} : vector<32x1xi32>
    %c32_i32 = arith.constant 32 : i32
    %6 = arith.muli %arg0, %c32_i32 : i32
    %7 = vector.broadcast %6 : i32 to vector<32x1xi32>
    %8 = arith.addi %5, %7 : vector<32x1xi32>
    %c16_i32 = arith.constant 16 : i32
    %9 = vector.broadcast %c16_i32 : i32 to vector<32x1xi32>
    %10 = arith.cmpi slt, %8, %9 : vector<32x1xi32>
    %c0_3 = arith.constant 0 : index
    %c0_4 = arith.constant 0 : index
    %11 = vector.load %arg3[%c0_3, %c0_4] : memref<32x128xi32, #tpu.memory_space<vmem>>, vector<32x128xi32>
    %cst = arith.constant dense<0> : vector<32x128xi32>
    %12 = arith.cmpi ne, %11, %cst : vector<32x128xi32>
    %13 = vector.broadcast %10 : vector<32x1xi1> to vector<32x128xi1>
    %14 = arith.andi %13, %12 : vector<32x128xi1>
    %cst_5 = arith.constant 0.000000e+00 : f32
    %15 = vector.broadcast %cst_5 : f32 to vector<32x128xf32>
    %16 = arith.select %14, %4, %15 : vector<32x128xi1>, vector<32x128xf32>
    %17 = vector.shape_cast %16 : vector<32x128xf32> to vector<4x8x128xf32>
    %cst_6 = arith.constant dense<0.000000e+00> : vector<8x128xf32>
    %18 = vector.multi_reduction <add>, %17, %cst_6 [0] : vector<4x8x128xf32> to vector<8x128xf32>
    %19 = vector.shape_cast %18 : vector<8x128xf32> to vector<1x8x128xf32>
    %cst_7 = arith.constant dense<0.000000e+00> : vector<1xf32>
    %20 = vector.multi_reduction <add>, %19, %cst_7 [1, 2] : vector<1x8x128xf32> to vector<1xf32>
    %21 = vector.shape_cast %20 : vector<1xf32> to vector<1x1x1xf32>
    %22 = vector.extract %21[0, 0, 0] : f32 from vector<1x1x1xf32>
    %c0_8 = arith.constant 0 : index
    %c0_9 = arith.constant 0 : index
    %23 = memref.load %arg4[%c0_8, %c0_9] : memref<1x1xf32, #tpu.memory_space<smem>>
    memref.store %22, %arg4[%c0_8, %c0_9] : memref<1x1xf32, #tpu.memory_space<smem>>
    return
  }
  func.func @transform_0(%arg0: i32) -> (i32, i32) {
    %c0_i32 = arith.constant 0 : i32
    %c0_i32_0 = arith.constant 0 : i32
    return %arg0, %c0_i32 : i32, i32
  }
  func.func @transform_1(%arg0: i32) -> (i32, i32) {
    %c0_i32 = arith.constant 0 : i32
    %c0_i32_0 = arith.constant 0 : i32
    return %arg0, %c0_i32 : i32, i32
  }
  func.func @transform_2(%arg0: i32) -> (i32, i32) {
    %c0_i32 = arith.constant 0 : i32
    %c0_i32_0 = arith.constant 0 : i32
    return %arg0, %c0_i32 : i32, i32
  }
  func.func @transform_3(%arg0: i32) -> (i32, i32) {
    %c0_i32 = arith.constant 0 : i32
    %c0_i32_0 = arith.constant 0 : i32
    return %arg0, %c0_i32 : i32, i32
  }
}

</mosaic_0001>

<llo_original>
// kernel: tpu_custom_call.1
$region0: #{tpu_custom_call.1}
  #allocation0 [shape = 'u32[]', space=smem, size = 0x4, offset = 0x4, fixed_abs, tag = 'smem constant byte address 0x4 - core index']
  #allocation1 [shape = 'u32[144,128]{1,0:T(1,128)}', space=vmem, size = 0x12000, scoped, tag = 'internal scratch']
  %s0 = inlined_call_operand.vmem [shape: f32[16,128], index: 0, kind: input, shape index: {}]
  %s1 = inlined_call_operand.hbm [shape: s32[16,128], index: 1, kind: input, shape index: {}]
  %s2 = inlined_call_operand.vmem [shape: s32[16,128], index: 2, kind: input, shape index: {}]
  %s3 = inlined_call_operand.hbm [shape: f32[1,1], index: 3, kind: output, shape index: {}]
  %s4 = sld [smem:[#allocation0]]
  $region26: #{tpu_custom_call.1} parent=0
    _
  %s6 = ssub.s32 1, %s4
  %s7 = scalar_select 0, %s6, %s4
  $region1: #{tpu_custom_call.1} parent=0
    #allocation2 [shape = 'u8[16384]{0}', space=vmem, size = 0x4000, scoped, tag = 'input window, operand 1, single buffered']
    #allocation3 [shape = 's32[1]{0}', space=sflag, size = 0x4, scoped, tag = 'scoped memory for tpu_custom_call.1']
    #allocation4 [shape = 's32[1]{0}', space=sflag, size = 0x4, scoped, tag = 'scoped memory for tpu_custom_call.1']
    #allocation5 [shape = 'u8[512]{0}', space=smem, size = 0x200, scoped, tag = 'output window, operand 0, single buffered']
    %8 = vsyncpa [#allocation3], 0
    %9 = vsyncpa [#allocation4], 0
    // Predicated region
    $region2: #{tpu_custom_call.1} parent=1 // pred_check
      _
    $region3: #{tpu_custom_call.1} parent=1 // pred_check_branch
      %11 = sbr.rel (0) target = $region5
    $region4: #{tpu_custom_call.1} parent=1 // pred_region
      _
    $region5: #{tpu_custom_call.1} parent=1 // pred_fallthru
      _
    // Predicated region
    $region6: #{tpu_custom_call.1} parent=1 // pred_check
      _
    $region7: #{tpu_custom_call.1} parent=1 // pred_check_branch
      %13 = sbr.rel (0) target = $region9
    $region8: #{tpu_custom_call.1} parent=1 // pred_region
      %s15 = ssub.s32 512, 256
      %16 = vsyncadd [#allocation3], %s15
      %s17 = sshll.u32 [#allocation2], 4
      %s18 = int_to_ptr.vmem [resolvable:$true] %s17
      %23 = dma.hbm_to_vmem [thread:$0]  %s1, 256, %s18, [#allocation3], 128, 128, 8
    $region9: #{tpu_custom_call.1} parent=1 // pred_fallthru
      _
    // Predicated region
    $region10: #{tpu_custom_call.1} parent=1 // pred_check
      _
    $region11: #{tpu_custom_call.1} parent=1 // pred_check_branch
      %25 = sbr.rel (0) target = $region13
    $region12: #{tpu_custom_call.1} parent=1 // pred_region
      _
    $region13: #{tpu_custom_call.1} parent=1 // pred_fallthru
      _
    // Predicated region
    $region14: #{tpu_custom_call.1} parent=1 // pred_check
      _
    $region15: #{tpu_custom_call.1} parent=1 // pred_check_branch
      %27 = sbr.rel (0) target = $region17
    $region16: #{tpu_custom_call.1} parent=1 // pred_region
      %28 = dma.done [#allocation3], 512
    $region17: #{tpu_custom_call.1} parent=1 // pred_fallthru
      _
    %v29 = vld [vmem:[%s0] sm:$0xff]
    %v30 = vld [vmem:[%s0 + $0x8] sm:$0xff]
    %v31 = vld [vmem:[%s0 + $0x10] sm:$0xff]
    %v32 = vld [vmem:[%s0 + $0x18] sm:$0xff]
    %v33 = vld [vmem:[#allocation2] sm:$0xff]
    %v34 = vld [vmem:[#allocation2 + $0x8] sm:$0xff]
    %v35 = vld [vmem:[#allocation2 + $0x10] sm:$0xff]
    %v36 = vld [vmem:[#allocation2 + $0x18] sm:$0xff]
    %v37 = vcvt.s32.f32 %v33
    %v38 = vcvt.s32.f32 %v34
    %v39 = vcvt.s32.f32 %v35
    %v40 = vcvt.s32.f32 %v36
    %v41 = vsub.f32 %v29, %v37
    %v42 = vsub.f32 %v30, %v38
    %v43 = vsub.f32 %v31, %v39
    %v44 = vsub.f32 %v32, %v40
    %v45 = vmul.f32 %v41, %v41
    %v46 = vmul.f32 %v42, %v42
    %v47 = vmul.f32 %v43, %v43
    %v48 = vmul.f32 %v44, %v44
    %v49 = vlaneseq
    %v50 = vshrl.u32 %v49, 7
    %v51 = vadd.s32 %v50, 8
    %v52 = vadd.s32 %v50, 16
    %v53 = vadd.s32 %v50, 24
    %s54 = smul.u32 0, 32
    %v55 = vstv %s54
    %v56 = vadd.s32 %v50, %v55
    %v57 = vadd.s32 %v51, %v55
    %v58 = vadd.s32 %v52, %v55
    %v59 = vadd.s32 %v53, %v55
    %vm60 = vcmp.lt.s32.totalorder %v56, 16
    %vm61 = vcmp.lt.s32.totalorder %v57, 16
    %vm62 = vcmp.lt.s32.totalorder %v58, 16
    %vm63 = vcmp.lt.s32.totalorder %v59, 16
    %v64 = vld [vmem:[%s2] sm:$0xff]
    %v65 = vld [vmem:[%s2 + $0x8] sm:$0xff]
    %v66 = vld [vmem:[%s2 + $0x10] sm:$0xff]
    %v67 = vld [vmem:[%s2 + $0x18] sm:$0xff]
    %vm68 = vcmp.ne.s32.totalorder %v64, 0
    %vm69 = vcmp.ne.s32.totalorder %v65, 0
    %vm70 = vcmp.ne.s32.totalorder %v66, 0
    %vm71 = vcmp.ne.s32.totalorder %v67, 0
    %v72 = vsel %vm60, 1, 0
    %v73 = vsel %vm61, 1, 0
    %v74 = vsel %vm62, 1, 0
    %v75 = vsel %vm63, 1, 0
    %vm76 = vcmp.eq.s32.totalorder %v72, 1
    %vm77 = vcmp.eq.s32.totalorder %v73, 1
    %vm78 = vcmp.eq.s32.totalorder %v74, 1
    %vm79 = vcmp.eq.s32.totalorder %v75, 1
    %vm80 = vmand %vm76, %vm68
    %vm81 = vmand %vm77, %vm69
    %vm82 = vmand %vm78, %vm70
    %vm83 = vmand %vm79, %vm71
    %v84 = vsel %vm80, %v45, 0.0
    %v85 = vsel %vm81, %v46, 0.0
    %v86 = vsel %vm82, %v47, 0.0
    %v87 = vsel %vm83, %v48, 0.0
    %v88 = vadd.f32 %v84, %v85
    %v89 = vadd.f32 %v88, %v86
    %v90 = vadd.f32 %v89, %v87
    %91 = vadd.xlane.f32.xlu0 %v90
    %v92 = vpop.xlane.xlu0 %91
    %v93 = vrot.slane %v92, 4
    %v94 = vadd.f32 %v92, %v93
    %v95 = vrot.slane %v94, 2
    %v96 = vadd.f32 %v94, %v95
    %v97 = vrot.slane %v96, 1
    %v98 = vadd.f32 %v96, %v97
    %s99 = vtos %v98
    %s100 = scalar_lea.smem [#allocation5], 0
    %101 = sst [smem:[%s100]] %s99
    // Predicated region
    $region18: #{tpu_custom_call.1} parent=1 // pred_check
      _
    $region19: #{tpu_custom_call.1} parent=1 // pred_check_branch
      %103 = sbr.rel (0) target = $region21
    $region20: #{tpu_custom_call.1} parent=1 // pred_region
      %s105 = ssub.s32 16, 16
      %106 = vsyncadd [#allocation4], %s105
      %109 = dma.smem_to_hbm [#allocation5], 16, %s3, [#allocation4]
    $region21: #{tpu_custom_call.1} parent=1 // pred_fallthru
      _
    // Predicated region
    $region22: #{tpu_custom_call.1} parent=1 // pred_check
      _
    $region23: #{tpu_custom_call.1} parent=1 // pred_check_branch
      %111 = sbr.rel (0) target = $region25
    $region24: #{tpu_custom_call.1} parent=1 // pred_region
      %112 = dma.done [#allocation4], 16
    $region25: #{tpu_custom_call.1} parent=1 // pred_fallthru
      _
    %113 = sfence
    %114 = vsyncpa [#allocation3], 1
    %115 = vsyncpa [#allocation4], 1

</llo_original>
